<compile_context>
chip_gen: v5e
topology: v5e:2x2
jax: 0.10.0
libtpu: 0.0.40
codegen_flags: <defaults>
</compile_context>

<pallas_src>
import functools

import numpy as np
import jax
import jax.numpy as jnp
from jax.experimental import pallas as pl
from jax.experimental.pallas import tpu as pltpu


def _round_up(x, m):
    return ((x + m - 1) // m) * m


def _deepnn_kernel(n_layers, r, f, x_ref, w_ref, o_ref):
    # x_ref : (TB, F)  f32  raw features (no padding)
    # w_ref : (R, L*R) bf16 packed weights; layer l occupies cols [l*R,(l+1)*R),
    #         weight rows [0, fan_in_l), its bias vector in row R-1.
    # o_ref : (TB, out_dim) f32 sigmoid prediction (out_dim == 1)
    h = x_ref[...]                       # (TB, F) f32
    kin = f                              # contraction width of current layer
    for l in range(n_layers):            # unrolled: 7 serial MXU dots
        w = w_ref[:kin, l * r:(l + 1) * r]        # (kin, R) bf16, static slice
        b = w_ref[r - 1:r, l * r:(l + 1) * r]     # (1, R)   bf16 bias row
        z = jnp.dot(h.astype(jnp.bfloat16), w,
                    preferred_element_type=jnp.float32)
        z = z + b.astype(jnp.float32)             # broadcast over sublanes
        if l < n_layers - 1:
            h = jnp.maximum(z, 0.0)      # ReLU; padded columns stay exactly 0
            kin = r
        else:
            zc = z[:, :o_ref.shape[1]]   # only the useful prediction column
            h = pl.reciprocal(1.0 + jnp.exp(-zc), approx=True)   # sigmoid
    o_ref[...] = h


def deepnn_forward(x, weights, biases, *, block_batch=512):
    """x: (B, F).  weights[i]: (in_i, out_i), biases[i]: (1, out_i)."""
    n_layers = len(weights)
    B, F = x.shape
    out_dim = weights[-1].shape[1]
    dims = [F] + [w.shape[1] for w in weights]

    # Uniform padded layer width; +1 reserves the bias row (row R-1).
    R = _round_up(max(dims) + 1, 128)

    # ---- pack all weights + biases into ONE bf16 (R, L*R) buffer ----
    wpack = np.zeros((R, n_layers * R), np.float32)
    for l, (w, b) in enumerate(zip(weights, biases)):
        fin, fout = w.shape
        wpack[:fin, l * R:l * R + fout] = np.asarray(w, np.float32)
        wpack[R - 1, l * R:l * R + fout] = np.asarray(b, np.float32).reshape(-1)
    wpack = jnp.asarray(wpack, jnp.bfloat16)

    # ---- batch tiling: biggest tile <= block_batch, but keep >= 2 parallel
    # grid steps whenever the batch can be split (v7x has 2 TensorCores) ----
    Bp8 = _round_up(B, 8)
    TB = min(block_batch, Bp8)
    while TB > 128 and Bp8 // TB < 2:
        TB //= 2
    Bp = _round_up(B, TB)

    xp = x.astype(jnp.float32)
    if Bp != B:
        xp = jnp.pad(xp, ((0, Bp - B), (0, 0)))

    out = pl.pallas_call(
        functools.partial(_deepnn_kernel, n_layers, R, F),
        out_shape=jax.ShapeDtypeStruct((Bp, out_dim), jnp.float32),
        grid=(Bp // TB,),
        in_specs=[
            # batch tile of raw features (last dim == full array dim -> legal)
            pl.BlockSpec((TB, F), lambda i: (i, 0)),
            # packed weights: constant block, VMEM-resident, single-buffered
            pl.BlockSpec((R, n_layers * R), lambda i: (0, 0),
                         pipeline_mode=pl.Buffered(1)),
        ],
        # only the prediction column is written back (128x less HBM writeback)
        out_specs=pl.BlockSpec((TB, out_dim), lambda i: (i, 0)),
        compiler_params=pltpu.CompilerParams(
            dimension_semantics=("parallel",)),
    )(xp, wpack)
    return out[:B]


def make_deepnn_params(key, input_size, hidden_layers, neurons_per_layer,
                       neuron_reduction_ratio):
    """Deterministic synthetic params matching DeepNN.__init__ shapes."""
    dims = [input_size, neurons_per_layer]
    n = neurons_per_layer
    for _ in range(hidden_layers - 1):
        n = int(n / neuron_reduction_ratio)
        dims.append(n)
    dims.append(1)  # final Linear(..., 1)

    weights, biases = [], []
    for i in range(len(dims) - 1):
        fan_in, fan_out = dims[i], dims[i + 1]
        key, wk, bk = jax.random.split(key, 3)
        bound = 1.0 / float(np.sqrt(fan_in))
        # stored as (in, out) = transpose of PyTorch's (out, in)
        w = jax.random.uniform(wk, (fan_in, fan_out), jnp.float32, -bound, bound)
        b = jax.random.uniform(bk, (1, fan_out), jnp.float32, -bound, bound)
        weights.append(w)
        biases.append(b)
    return weights, biases


def deepnn_reference(x, weights, biases):
    h = x
    n = len(weights)
    for i, (w, b) in enumerate(zip(weights, biases)):
        z = h @ w + b
        h = jnp.maximum(z, 0.0) if i < n - 1 else jax.nn.sigmoid(z)
    return h


if __name__ == "__main__":
    key = jax.random.PRNGKey(0)
    key, xk = jax.random.split(key)

    # Shapes consistent with the module's forward; batch large enough to give
    # 2 parallel batch tiles (TB=128, grid=(2,)).
    batch = 256
    input_size = 32
    hidden_layers = 6
    neurons_per_layer = 64
    neuron_reduction_ratio = 2

    x = jax.random.normal(xk, (batch, input_size), jnp.float32)
    weights, biases = make_deepnn_params(
        key, input_size, hidden_layers, neurons_per_layer, neuron_reduction_ratio)

    out = deepnn_forward(x, weights, biases)
    out = jax.block_until_ready(out)

    ref = deepnn_reference(x, weights, biases)
    assert out.shape == (batch, 1), out.shape
    # bf16 MXU inputs + approx reciprocal -> compare at ~1e-2 (per review note)
    assert jnp.allclose(out, ref, atol=2e-2, rtol=2e-2), \
        float(jnp.max(jnp.abs(out - ref)))

    print("KERNEL_OK")
</pallas_src>

<mosaic_0001>
module attributes {stable_mosaic.version = 11 : i64} {
  func.func @_deepnn_kernel(%arg0: i32, %arg1: memref<128x32xf32, #tpu.memory_space<vmem>>, %arg2: memref<128x896xbf16, #tpu.memory_space<vmem>>, %arg3: memref<128x1xf32, #tpu.memory_space<vmem>>) attributes {dimension_semantics = [#tpu.dimension_semantics<parallel>], iteration_bounds = array<i64: 2>, scalar_prefetch = 0 : i64, scratch_operands = 0 : i64, tpu.core_type = #tpu.core_type<tc>, window_params = [{transform_indices = @transform_0, window_bounds = array<i64: 128, 32>}, {pipeline_mode = #tpu.pipeline_mode<synchronous>, transform_indices = @transform_1, window_bounds = array<i64: 128, 896>}, {transform_indices = @transform_2, window_bounds = array<i64: 128, 1>}]} {
    %c0 = arith.constant 0 : index
    %c0_0 = arith.constant 0 : index
    %0 = vector.load %arg1[%c0, %c0_0] : memref<128x32xf32, #tpu.memory_space<vmem>>, vector<128x32xf32>
    %c0_1 = arith.constant 0 : index
    %c0_2 = arith.constant 0 : index
    %1 = vector.load %arg2[%c0_1, %c0_2] : memref<128x896xbf16, #tpu.memory_space<vmem>>, vector<32x128xbf16>
    %c127 = arith.constant 127 : index
    %c0_3 = arith.constant 0 : index
    %2 = vector.load %arg2[%c127, %c0_3] : memref<128x896xbf16, #tpu.memory_space<vmem>>, vector<1x128xbf16>
    %3 = arith.truncf %0 : vector<128x32xf32> to vector<128x32xbf16>
    %cst = arith.constant dense<0.000000e+00> : vector<128x128xf32>
    %4 = tpu.matmul %3, %1, %cst {dimension_numbers = #tpu.dot_dimension_numbers<[1], [0], [0], [1], [0, 0, 1, 1], [], []>} : vector<128x32xbf16>, vector<32x128xbf16>, vector<128x128xf32> -> vector<128x128xf32>
    %5 = arith.extf %2 : vector<1x128xbf16> to vector<1x128xf32>
    %6 = vector.broadcast %5 : vector<1x128xf32> to vector<128x128xf32>
    %7 = arith.addf %4, %6 : vector<128x128xf32>
    %cst_4 = arith.constant 0.000000e+00 : f32
    %8 = vector.broadcast %cst_4 : f32 to vector<128x128xf32>
    %9 = arith.maximumf %7, %8 : vector<128x128xf32>
    %c0_5 = arith.constant 0 : index
    %c128 = arith.constant 128 : index
    %10 = vector.load %arg2[%c0_5, %c128] : memref<128x896xbf16, #tpu.memory_space<vmem>>, vector<128x128xbf16>
    %c127_6 = arith.constant 127 : index
    %c128_7 = arith.constant 128 : index
    %11 = vector.load %arg2[%c127_6, %c128_7] : memref<128x896xbf16, #tpu.memory_space<vmem>>, vector<1x128xbf16>
    %12 = arith.truncf %9 : vector<128x128xf32> to vector<128x128xbf16>
    %cst_8 = arith.constant dense<0.000000e+00> : vector<128x128xf32>
    %13 = tpu.matmul %12, %10, %cst_8 {dimension_numbers = #tpu.dot_dimension_numbers<[1], [0], [0], [1], [0, 0, 1, 1], [], []>} : vector<128x128xbf16>, vector<128x128xbf16>, vector<128x128xf32> -> vector<128x128xf32>
    %14 = arith.extf %11 : vector<1x128xbf16> to vector<1x128xf32>
    %15 = vector.broadcast %14 : vector<1x128xf32> to vector<128x128xf32>
    %16 = arith.addf %13, %15 : vector<128x128xf32>
    %cst_9 = arith.constant 0.000000e+00 : f32
    %17 = vector.broadcast %cst_9 : f32 to vector<128x128xf32>
    %18 = arith.maximumf %16, %17 : vector<128x128xf32>
    %c0_10 = arith.constant 0 : index
    %c256 = arith.constant 256 : index
    %19 = vector.load %arg2[%c0_10, %c256] : memref<128x896xbf16, #tpu.memory_space<vmem>>, vector<128x128xbf16>
    %c127_11 = arith.constant 127 : index
    %c256_12 = arith.constant 256 : index
    %20 = vector.load %arg2[%c127_11, %c256_12] : memref<128x896xbf16, #tpu.memory_space<vmem>>, vector<1x128xbf16>
    %21 = arith.truncf %18 : vector<128x128xf32> to vector<128x128xbf16>
    %cst_13 = arith.constant dense<0.000000e+00> : vector<128x128xf32>
    %22 = tpu.matmul %21, %19, %cst_13 {dimension_numbers = #tpu.dot_dimension_numbers<[1], [0], [0], [1], [0, 0, 1, 1], [], []>} : vector<128x128xbf16>, vector<128x128xbf16>, vector<128x128xf32> -> vector<128x128xf32>
    %23 = arith.extf %20 : vector<1x128xbf16> to vector<1x128xf32>
    %24 = vector.broadcast %23 : vector<1x128xf32> to vector<128x128xf32>
    %25 = arith.addf %22, %24 : vector<128x128xf32>
    %cst_14 = arith.constant 0.000000e+00 : f32
    %26 = vector.broadcast %cst_14 : f32 to vector<128x128xf32>
    %27 = arith.maximumf %25, %26 : vector<128x128xf32>
    %c0_15 = arith.constant 0 : index
    %c384 = arith.constant 384 : index
    %28 = vector.load %arg2[%c0_15, %c384] : memref<128x896xbf16, #tpu.memory_space<vmem>>, vector<128x128xbf16>
    %c127_16 = arith.constant 127 : index
    %c384_17 = arith.constant 384 : index
    %29 = vector.load %arg2[%c127_16, %c384_17] : memref<128x896xbf16, #tpu.memory_space<vmem>>, vector<1x128xbf16>
    %30 = arith.truncf %27 : vector<128x128xf32> to vector<128x128xbf16>
    %cst_18 = arith.constant dense<0.000000e+00> : vector<128x128xf32>
    %31 = tpu.matmul %30, %28, %cst_18 {dimension_numbers = #tpu.dot_dimension_numbers<[1], [0], [0], [1], [0, 0, 1, 1], [], []>} : vector<128x128xbf16>, vector<128x128xbf16>, vector<128x128xf32> -> vector<128x128xf32>
    %32 = arith.extf %29 : vector<1x128xbf16> to vector<1x128xf32>
    %33 = vector.broadcast %32 : vector<1x128xf32> to vector<128x128xf32>
    %34 = arith.addf %31, %33 : vector<128x128xf32>
    %cst_19 = arith.constant 0.000000e+00 : f32
    %35 = vector.broadcast %cst_19 : f32 to vector<128x128xf32>
    %36 = arith.maximumf %34, %35 : vector<128x128xf32>
    %c0_20 = arith.constant 0 : index
    %c512 = arith.constant 512 : index
    %37 = vector.load %arg2[%c0_20, %c512] : memref<128x896xbf16, #tpu.memory_space<vmem>>, vector<128x128xbf16>
    %c127_21 = arith.constant 127 : index
    %c512_22 = arith.constant 512 : index
    %38 = vector.load %arg2[%c127_21, %c512_22] : memref<128x896xbf16, #tpu.memory_space<vmem>>, vector<1x128xbf16>
    %39 = arith.truncf %36 : vector<128x128xf32> to vector<128x128xbf16>
    %cst_23 = arith.constant dense<0.000000e+00> : vector<128x128xf32>
    %40 = tpu.matmul %39, %37, %cst_23 {dimension_numbers = #tpu.dot_dimension_numbers<[1], [0], [0], [1], [0, 0, 1, 1], [], []>} : vector<128x128xbf16>, vector<128x128xbf16>, vector<128x128xf32> -> vector<128x128xf32>
    %41 = arith.extf %38 : vector<1x128xbf16> to vector<1x128xf32>
    %42 = vector.broadcast %41 : vector<1x128xf32> to vector<128x128xf32>
    %43 = arith.addf %40, %42 : vector<128x128xf32>
    %cst_24 = arith.constant 0.000000e+00 : f32
    %44 = vector.broadcast %cst_24 : f32 to vector<128x128xf32>
    %45 = arith.maximumf %43, %44 : vector<128x128xf32>
    %c0_25 = arith.constant 0 : index
    %c640 = arith.constant 640 : index
    %46 = vector.load %arg2[%c0_25, %c640] : memref<128x896xbf16, #tpu.memory_space<vmem>>, vector<128x128xbf16>
    %c127_26 = arith.constant 127 : index
    %c640_27 = arith.constant 640 : index
    %47 = vector.load %arg2[%c127_26, %c640_27] : memref<128x896xbf16, #tpu.memory_space<vmem>>, vector<1x128xbf16>
    %48 = arith.truncf %45 : vector<128x128xf32> to vector<128x128xbf16>
    %cst_28 = arith.constant dense<0.000000e+00> : vector<128x128xf32>
    %49 = tpu.matmul %48, %46, %cst_28 {dimension_numbers = #tpu.dot_dimension_numbers<[1], [0], [0], [1], [0, 0, 1, 1], [], []>} : vector<128x128xbf16>, vector<128x128xbf16>, vector<128x128xf32> -> vector<128x128xf32>
    %50 = arith.extf %47 : vector<1x128xbf16> to vector<1x128xf32>
    %51 = vector.broadcast %50 : vector<1x128xf32> to vector<128x128xf32>
    %52 = arith.addf %49, %51 : vector<128x128xf32>
    %cst_29 = arith.constant 0.000000e+00 : f32
    %53 = vector.broadcast %cst_29 : f32 to vector<128x128xf32>
    %54 = arith.maximumf %52, %53 : vector<128x128xf32>
    %c0_30 = arith.constant 0 : index
    %c768 = arith.constant 768 : index
    %55 = vector.load %arg2[%c0_30, %c768] : memref<128x896xbf16, #tpu.memory_space<vmem>>, vector<128x128xbf16>
    %c127_31 = arith.constant 127 : index
    %c768_32 = arith.constant 768 : index
    %56 = vector.load %arg2[%c127_31, %c768_32] : memref<128x896xbf16, #tpu.memory_space<vmem>>, vector<1x128xbf16>
    %57 = arith.truncf %54 : vector<128x128xf32> to vector<128x128xbf16>
    %cst_33 = arith.constant dense<0.000000e+00> : vector<128x128xf32>
    %58 = tpu.matmul %57, %55, %cst_33 {dimension_numbers = #tpu.dot_dimension_numbers<[1], [0], [0], [1], [0, 0, 1, 1], [], []>} : vector<128x128xbf16>, vector<128x128xbf16>, vector<128x128xf32> -> vector<128x128xf32>
    %59 = arith.extf %56 : vector<1x128xbf16> to vector<1x128xf32>
    %60 = vector.broadcast %59 : vector<1x128xf32> to vector<128x128xf32>
    %61 = arith.addf %58, %60 : vector<128x128xf32>
    %62 = vector.extract_strided_slice %61 {offsets = [0, 0], sizes = [128, 1], strides = [1, 1]} : vector<128x128xf32> to vector<128x1xf32>
    %cst_34 = arith.constant 0.000000e+00 : f32
    %63 = vector.broadcast %cst_34 : f32 to vector<128x1xf32>
    %64 = arith.subf %63, %62 : vector<128x1xf32>
    %65 = math.exp %64 : vector<128x1xf32>
    %cst_35 = arith.constant 1.000000e+00 : f32
    %66 = vector.broadcast %cst_35 : f32 to vector<128x1xf32>
    %67 = arith.addf %66, %65 : vector<128x1xf32>
    %68 = tpu.reciprocal %67 {approx = true} : vector<128x1xf32> -> vector<128x1xf32>
    %c0_36 = arith.constant 0 : index
    %c0_37 = arith.constant 0 : index
    %69 = vector.load %arg3[%c0_36, %c0_37] : memref<128x1xf32, #tpu.memory_space<vmem>>, vector<128x1xf32>
    tpu.vector_store %arg3[%c0_36, %c0_37], %68 {strides = array<i32>} : memref<128x1xf32, #tpu.memory_space<vmem>>, vector<128x1xf32>,
    return
  }
  func.func @transform_0(%arg0: i32) -> (i32, i32) {
    %c0_i32 = arith.constant 0 : i32
    %c0_i32_0 = arith.constant 0 : i32
    return %arg0, %c0_i32 : i32, i32
  }
  func.func @transform_1(%arg0: i32) -> (i32, i32) {
    %c0_i32 = arith.constant 0 : i32
    %c0_i32_0 = arith.constant 0 : i32
    %c0_i32_1 = arith.constant 0 : i32
    return %c0_i32, %c0_i32_0 : i32, i32
  }
  func.func @transform_2(%arg0: i32) -> (i32, i32) {
    %c0_i32 = arith.constant 0 : i32
    %c0_i32_0 = arith.constant 0 : i32
    return %arg0, %c0_i32 : i32, i32
  }
}

</mosaic_0001>

<llo_original>
// kernel: tpu_custom_call.1
$region0: #{tpu_custom_call.1}
  #allocation0 [shape = 'u32[]', space=smem, size = 0x4, offset = 0x4, fixed_abs, tag = 'smem constant byte address 0x4 - core index']
  #allocation1 [shape = 'u32[72,128]{1,0:T(1,128)}', space=vmem, size = 0x9000, scoped, tag = 'internal scratch']
  %s0 = inlined_call_operand.vmem [shape: f32[256,32], index: 0, kind: input, shape index: {}]
  %s1 = inlined_call_operand.hbm [shape: bf16[128,896], index: 1, kind: input, shape index: {}]
  %s2 = inlined_call_operand.vmem [shape: f32[256,1], index: 2, kind: output, shape index: {}]
  %s3 = sld [smem:[#allocation0]]
  $region45: #{tpu_custom_call.1} parent=0
    _
  %s5 = ssub.s32 1, %s3
  %s6 = scalar_select 0, %s5, %s3
  $region1: #{tpu_custom_call.1} parent=0
    #allocation2 [shape = 'u8[229376]{0}', space=vmem, size = 0x38000, scoped, tag = 'input window, operand 1, single buffered']
    #allocation3 [shape = 's32[2]{0}', space=sflag, size = 0x8, scoped, tag = 'scoped memory for tpu_custom_call.1']
    %7 = vsyncpa [#allocation3], 0
    loop: start=0, step=1, limit=4
    $region2: #{tpu_custom_call.1} parent=1 // loop_pre_header
      _
    $region3: #{tpu_custom_call.1} parent=1 // loop_header
      %s9 = sphi 0, %s13
      %p10 = scmp.ge.s32.totalorder %s9, 4
      %s19 = sphi 0, %s21
      %s22 = sphi 0, %s19
      %s23 = sphi 0, %s22
      %s39 = sphi 0, %s23
      %s43 = sphi 0, %s43
      %s45 = sphi 0, %s43
      %s46 = sphi 0, %s45
      %s60 = sphi 0, %s46
      %s66 = sphi 0, %s68
      %s69 = sphi 0, %s66
      %s70 = sphi 0, %s69
      %s86 = sphi 0, %s70
    $region4: #{tpu_custom_call.1} parent=1 // loop_header_branch
      %12 = sbr.rel (%p10) target = $region8
    $region5: #{tpu_custom_call.1} parent=1 // loop_body
      %s14 = ssub.s32 %s9, 1
      %s15 = ssub.s32 %s9, 2
      %s16 = sadd.s32 %s9, 1
      %s17 = ssub.s32 %s9, %s16
      %p18 = scmp.eq.s32.totalorder %s17, 0
      %s20 = sadd.s32 %s19, 1
      %s21 = scalar_select %p18, %s19, %s20
      %p24 = pneg %p18
      %p25 = scmp.eq.s32.totalorder %s9, 1
      %p26 = por %p24, %p25
      %p27 = scmp.ne.s32.totalorder %s19, %s22
      %p28 = scmp.eq.s32.totalorder %s9, 0
      %p29 = por %p27, %p28
      %p30 = scmp.ne.s32.totalorder %s19, %s22
      %p31 = scmp.eq.s32.totalorder %s14, 1
      %p32 = por %p30, %p31
      %p33 = scmp.ne.s32.totalorder %s22, %s23
      %p34 = scmp.eq.s32.totalorder %s14, 0
      %p35 = por %p33, %p34
      %p36 = scmp.ne.s32.totalorder %s22, %s23
      %p37 = scmp.eq.s32.totalorder %s15, 1
      %p38 = por %p36, %p37
      %p40 = scmp.ne.s32.totalorder %s23, %s39
      %p41 = scmp.eq.s32.totalorder %s15, 0
      %p42 = por %p40, %p41
      %s44 = sadd.s32 %s43, 1
      %p47 = scmp.eq.s32.totalorder %s9, 1
      %p48 = scmp.ne.s32.totalorder %s43, %s45
      %p49 = scmp.eq.s32.totalorder %s9, 0
      %p50 = por %p48, %p49
      %p51 = scmp.ne.s32.totalorder %s43, %s45
      %p52 = scmp.eq.s32.totalorder %s14, 1
      %p53 = por %p51, %p52
      %p54 = scmp.ne.s32.totalorder %s45, %s46
      %p55 = scmp.eq.s32.totalorder %s14, 0
      %p56 = por %p54, %p55
      %p57 = scmp.ne.s32.totalorder %s45, %s46
      %p58 = scmp.eq.s32.totalorder %s15, 1
      %p59 = por %p57, %p58
      %p61 = scmp.ne.s32.totalorder %s46, %s60
      %p62 = scmp.eq.s32.totalorder %s15, 0
      %p63 = por %p61, %p62
      %s64 = ssub.s32 %s9, %s16
      %p65 = scmp.eq.s32.totalorder %s64, 0
      %s67 = sadd.s32 %s66, 1
      %s68 = scalar_select %p65, %s66, %s67
      %p71 = pneg %p65
      %p72 = scmp.eq.s32.totalorder %s9, 1
      %p73 = por %p71, %p72
      %p74 = scmp.ne.s32.totalorder %s66, %s69
      %p75 = scmp.eq.s32.totalorder %s9, 0
      %p76 = por %p74, %p75
      %p77 = scmp.ne.s32.totalorder %s66, %s69
      %p78 = scmp.eq.s32.totalorder %s14, 1
      %p79 = por %p77, %p78
      %p80 = scmp.ne.s32.totalorder %s69, %s70
      %p81 = scmp.eq.s32.totalorder %s14, 0
      %p82 = por %p80, %p81
      %p83 = scmp.ne.s32.totalorder %s69, %s70
      %p84 = scmp.eq.s32.totalorder %s15, 1
      %p85 = por %p83, %p84
      %p87 = scmp.ne.s32.totalorder %s70, %s86
      %p88 = scmp.eq.s32.totalorder %s15, 0
      %p89 = por %p87, %p88
      %p90 = scmp.le.s32.totalorder 1, %s9
      %p91 = scmp.lt.s32.totalorder %s9, 3
      %p92 = pnand %p90, %p91
      %p93 = pneg %p92
      // Predicated region
      $region9: #{tpu_custom_call.1} parent=5 // pred_check
        _
      $region10: #{tpu_custom_call.1} parent=5 // pred_check_branch
        %95 = sbr.rel (%p92) target = $region12
      $region11: #{tpu_custom_call.1} parent=5 // pred_region
        %s96 = ssub.s32 %s9, 1
        // Predicated region
        $region13: #{tpu_custom_call.1} parent=11 // pred_check
          %p97 = pneg %p56
        $region14: #{tpu_custom_call.1} parent=11 // pred_check_branch
          %99 = sbr.rel (%p97) target = $region16
        $region15: #{tpu_custom_call.1} parent=11 // pred_region
          %101 = vsyncadd [#allocation3], 0
          %s102 = sshll.u32 %s1, 4
          %s103 = int_to_ptr.hbm [resolvable:$true] %s102
          %s104 = sshll.u32 [#allocation2], 4
          %s105 = int_to_ptr.vmem [resolvable:$true] %s104
          %110 = dma.hbm_to_vmem [thread:$0]  %s103, 7168, %s105, [#allocation3], 448, 448, 28
        $region16: #{tpu_custom_call.1} parent=11 // pred_fallthru
          _
      $region12: #{tpu_custom_call.1} parent=5 // pred_fallthru
        _
      %p111 = scmp.lt.s32.totalorder %s9, 2
      // Predicated region
      $region17: #{tpu_custom_call.1} parent=5 // pred_check
        %p112 = pneg %p111
      $region18: #{tpu_custom_call.1} parent=5 // pred_check_branch
        %114 = sbr.rel (%p112) target = $region20
      $region19: #{tpu_custom_call.1} parent=5 // pred_region
        // Predicated region
        $region21: #{tpu_custom_call.1} parent=19 // pred_check
          %p115 = pneg %p29
        $region22: #{tpu_custom_call.1} parent=19 // pred_check_branch
          %117 = sbr.rel (%p115) target = $region24
        $region23: #{tpu_custom_call.1} parent=19 // pred_region
          %s118 = smul.u32 16, %s9
          %p119 = scmp.lt.s32.totalorder %s118, 31
          %s120 = scalar_select %p119, %s118, 31
          %s121 = smul.addr %s120, 8
          %s122 = scalar_lea.vmem %s0, %s121
          %s123 = smul.u32 16, %s9
        $region24: #{tpu_custom_call.1} parent=19 // pred_fallthru
          _
      $region20: #{tpu_custom_call.1} parent=5 // pred_fallthru
        _
      %p124 = scmp.le.s32.totalorder 1, %s9
      %p125 = scmp.lt.s32.totalorder %s9, 3
      %p126 = pnand %p124, %p125
      %p127 = pneg %p126
      // Predicated region
      $region25: #{tpu_custom_call.1} parent=5 // pred_check
        _
      $region26: #{tpu_custom_call.1} parent=5 // pred_check_branch
        %129 = sbr.rel (%p126) target = $region28
      $region27: #{tpu_custom_call.1} parent=5 // pred_region
        %s130 = ssub.s32 %s9, 1
        // Predicated region
        $region29: #{tpu_custom_call.1} parent=27 // pred_check
          %p131 = pneg %p56
        $region30: #{tpu_custom_call.1} parent=27 // pred_check_branch
          %133 = sbr.rel (%p131) target = $region32
        $region31: #{tpu_custom_call.1} parent=27 // pred_region
          %135 = dma.done [#allocation3], 7168
        $region32: #{tpu_custom_call.1} parent=27 // pred_fallthru
          _
        %s136 = smul.u32 16, %s14
        %p137 = scmp.lt.s32.totalorder %s136, 31
        %s138 = scalar_select %p137, %s136, 31
        %s139 = smul.addr %s138, 8
        %s140 = scalar_lea.vmem %s0, %s139
        %p141 = pneg %p35
        %p142 = pneg %p32
        %p143 = pneg %p56
        %p144 = pneg %p53
        %p145 = pneg %p82
        %p146 = pneg %p79
        %s147 = smul.u32 16, %s14
        %p148 = scmp.lt.s32.totalorder %s147, 31
        %s149 = scalar_select %p148, %s147, 31
        %s150 = smul.addr %s149, 8
        %s151 = scalar_lea.vmem %s2, %s150
        %s152 = smul.u32 16, %s14
        %p153 = scmp.lt.s32.totalorder %s152, 31
        %s154 = scalar_select %p153, %s152, 31
        %s155 = smul.addr %s154, 8
        %s156 = scalar_lea.vmem %s0, %s155
        %s157 = smul.u32 16, %s14
        %s158 = smul.u32 16, %s14
        %p159 = scmp.lt.s32.totalorder %s158, 31
        %s160 = scalar_select %p159, %s158, 31
        %s161 = smul.addr %s160, 8
        %s162 = scalar_lea.vmem %s2, %s161
        %s163 = smul.u32 16, %s14
        %v165 = vld [vmem:[%s156] sm:$0xff]
        %v166 = vld [vmem:[%s156 + $0x8] sm:$0xff]
        %v167 = vld [vmem:[%s156 + $0x10] sm:$0xff]
        %v168 = vld [vmem:[%s156 + $0x18] sm:$0xff]
        %v169 = vld [vmem:[%s156 + $0x20] sm:$0xff]
        %v170 = vld [vmem:[%s156 + $0x28] sm:$0xff]
        %v171 = vld [vmem:[%s156 + $0x30] sm:$0xff]
        %v172 = vld [vmem:[%s156 + $0x38] sm:$0xff]
        %v173 = vld [vmem:[%s156 + $0x40] sm:$0xff]
        %v174 = vld [vmem:[%s156 + $0x48] sm:$0xff]
        %v175 = vld [vmem:[%s156 + $0x50] sm:$0xff]
        %v176 = vld [vmem:[%s156 + $0x58] sm:$0xff]
        %v177 = vld [vmem:[%s156 + $0x60] sm:$0xff]
        %v178 = vld [vmem:[%s156 + $0x68] sm:$0xff]
        %v179 = vld [vmem:[%s156 + $0x70] sm:$0xff]
        %v180 = vld [vmem:[%s156 + $0x78] sm:$0xff]
        %v181 = vld [vmem:[#allocation2] sm:$0xf]
        %v182 = vld [vmem:[#allocation2 + $0x1c] sm:$0xf]
        %v183 = vld [vmem:[#allocation2 + $0x38] sm:$0xf]
        %v184 = vld [vmem:[#allocation2 + $0x54] sm:$0xf]
        %v185 = vld [vmem:[#allocation2 + $0x1a4] sm:$0x8]
        %v186 = vpack.c.bf16 %v166, %v165
        %v187 = vpack.c.bf16 %v168, %v167
        %v188 = vpack.c.bf16 %v170, %v169
        %v189 = vpack.c.bf16 %v172, %v171
        %v190 = vpack.c.bf16 %v174, %v173
        %v191 = vpack.c.bf16 %v176, %v175
        %v192 = vpack.c.bf16 %v178, %v177
        %v193 = vpack.c.bf16 %v180, %v179
        %v194 = vunpack.c.l.bf16 %v185
        %v195 = vperm.slane %v194, 7
        %v200 = vunpack.c.l.b16 %v181
        %v201 = vunpack.c.l.b16 %v182
        %v202 = vunpack.c.l.b16 %v183
        %v203 = vunpack.c.l.b16 %v184
        %v204 = vpack.c.b16 %v201, %v200
        %v205 = vpack.c.b16 %v203, %v202
        %vm208 = vcmask 261120
        %v210 = vsel %vm208, %v186, 0
        %v213 = vsel %vm208, %v187, 0
        %v216 = vsel %vm208, %v188, 0
        %v219 = vsel %vm208, %v189, 0
        %v222 = vsel %vm208, %v190, 0
        %v225 = vsel %vm208, %v191, 0
        %v228 = vsel %vm208, %v192, 0
        %v231 = vsel %vm208, %v193, 0
        %233 = vmatpush.bf16.msra.mxu0 0
        %234 = vmatpush.bf16.msra.mxu0 0
        %235 = vmatpush.bf16.msra.mxu0 0
        %236 = vmatpush.bf16.msra.mxu0 0
        %237 = vmatpush.bf16.msra.mxu0 0
        %238 = vmatpush.bf16.msra.mxu0 0
        %239 = vmatpush.bf16.msra.mxu0 %v205
        %240 = vmatpush.bf16.msra.mxu0 %v204
        %241 = vmatmul.bf16.gmra.mxu0 %v210
        %v242 = vpop.f32.mrf.mxu0
        %v243 = vadd.f32 %v195, %v242
        %v244 = vpop.f32.mrf.mxu0
        %v245 = vadd.f32 %v195, %v244
        %246 = vmatmul.bf16.gmra.mxu0 %v213
        %v247 = vpop.f32.mrf.mxu0
        %v248 = vadd.f32 %v195, %v247
        %v249 = vpop.f32.mrf.mxu0
        %v250 = vadd.f32 %v195, %v249
        %251 = vmatmul.bf16.gmra.mxu0 %v216
        %v252 = vpop.f32.mrf.mxu0
        %v253 = vadd.f32 %v195, %v252
        %v254 = vpop.f32.mrf.mxu0
        %v255 = vadd.f32 %v195, %v254
        %256 = vmatmul.bf16.gmra.mxu0 %v219
        %v257 = vpop.f32.mrf.mxu0
        %v258 = vadd.f32 %v195, %v257
        %v259 = vpop.f32.mrf.mxu0
        %v260 = vadd.f32 %v195, %v259
        %261 = vmatmul.bf16.gmra.mxu0 %v222
        %v262 = vpop.f32.mrf.mxu0
        %v263 = vadd.f32 %v195, %v262
        %v264 = vpop.f32.mrf.mxu0
        %v265 = vadd.f32 %v195, %v264
        %266 = vmatmul.bf16.gmra.mxu0 %v225
        %v267 = vpop.f32.mrf.mxu0
        %v268 = vadd.f32 %v195, %v267
        %v269 = vpop.f32.mrf.mxu0
        %v270 = vadd.f32 %v195, %v269
        %271 = vmatmul.bf16.gmra.mxu0 %v228
        %v272 = vpop.f32.mrf.mxu0
        %v273 = vadd.f32 %v195, %v272
        %v274 = vpop.f32.mrf.mxu0
        %v275 = vadd.f32 %v195, %v274
        %276 = vmatmul.bf16.gmra.mxu0 %v231
        %v277 = vpop.f32.mrf.mxu0
        %v278 = vadd.f32 %v195, %v277
        %v279 = vpop.f32.mrf.mxu0
        %v280 = vadd.f32 %v195, %v279
        %281 = vdwg.mxu0
        %v282 = vmax.f32 %v243, 0.0
        %v283 = vmax.f32 %v245, 0.0
        %v284 = vmax.f32 %v248, 0.0
        %v285 = vmax.f32 %v250, 0.0
        %v286 = vmax.f32 %v253, 0.0
        %v287 = vmax.f32 %v255, 0.0
        %v288 = vmax.f32 %v258, 0.0
        %v289 = vmax.f32 %v260, 0.0
        %v290 = vmax.f32 %v263, 0.0
        %v291 = vmax.f32 %v265, 0.0
        %v292 = vmax.f32 %v268, 0.0
        %v293 = vmax.f32 %v270, 0.0
        %v294 = vmax.f32 %v273, 0.0
        %v295 = vmax.f32 %v275, 0.0
        %v296 = vmax.f32 %v278, 0.0
        %v297 = vmax.f32 %v280, 0.0
        %v298 = vld [vmem:[#allocation2 + $0x4] sm:$0xf]
        %v299 = vld [vmem:[#allocation2 + $0x20] sm:$0xf]
        %v300 = vld [vmem:[#allocation2 + $0x3c] sm:$0xf]
        %v301 = vld [vmem:[#allocation2 + $0x58] sm:$0xf]
        %v302 = vld [vmem:[#allocation2 + $0x74] sm:$0xf]
        %v303 = vld [vmem:[#allocation2 + $0x90] sm:$0xf]
        %v304 = vld [vmem:[#allocation2 + $0xac] sm:$0xf]
        %v305 = vld [vmem:[#allocation2 + $0xc8] sm:$0xf]
        %v306 = vld [vmem:[#allocation2 + $0xe4] sm:$0xf]
        %v307 = vld [vmem:[#allocation2 + $0x100] sm:$0xf]
        %v308 = vld [vmem:[#allocation2 + $0x11c] sm:$0xf]
        %v309 = vld [vmem:[#allocation2 + $0x138] sm:$0xf]
        %v310 = vld [vmem:[#allocation2 + $0x154] sm:$0xf]
        %v311 = vld [vmem:[#allocation2 + $0x170] sm:$0xf]
        %v312 = vld [vmem:[#allocation2 + $0x18c] sm:$0xf]
        %v313 = vld [vmem:[#allocation2 + $0x1a8] sm:$0xf]
        %v314 = vld [vmem:[#allocation2 + $0x1a8] sm:$0x8]
        %v315 = vpack.c.bf16 %v283, %v282
        %v316 = vpack.c.bf16 %v285, %v284
        %v317 = vpack.c.bf16 %v287, %v286
        %v318 = vpack.c.bf16 %v289, %v288
        %v319 = vpack.c.bf16 %v291, %v290
        %v320 = vpack.c.bf16 %v293, %v292
        %v321 = vpack.c.bf16 %v295, %v294
        %v322 = vpack.c.bf16 %v297, %v296
        %v323 = vunpack.c.l.bf16 %v314
        %v324 = vperm.slane %v323, 7
        %v341 = vunpack.c.l.b16 %v298
        %v342 = vunpack.c.l.b16 %v299
        %v343 = vunpack.c.l.b16 %v300
        %v344 = vunpack.c.l.b16 %v301
        %v345 = vunpack.c.l.b16 %v302
        %v346 = vunpack.c.l.b16 %v303
        %v347 = vunpack.c.l.b16 %v304
        %v348 = vunpack.c.l.b16 %v305
        %v349 = vunpack.c.l.b16 %v306
        %v350 = vunpack.c.l.b16 %v307
        %v351 = vunpack.c.l.b16 %v308
        %v352 = vunpack.c.l.b16 %v309
        %v353 = vunpack.c.l.b16 %v310
        %v354 = vunpack.c.l.b16 %v311
        %v355 = vunpack.c.l.b16 %v312
        %v356 = vunpack.c.l.b16 %v313
        %v357 = vpack.c.b16 %v342, %v341
        %v358 = vpack.c.b16 %v344, %v343
        %v359 = vpack.c.b16 %v346, %v345
        %v360 = vpack.c.b16 %v348, %v347
        %v361 = vpack.c.b16 %v350, %v349
        %v362 = vpack.c.b16 %v352, %v351
        %v363 = vpack.c.b16 %v354, %v353
        %v364 = vpack.c.b16 %v356, %v355
        %373 = vmatpush.bf16.msra.mxu0 %v364
        %374 = vmatpush.bf16.msra.mxu0 %v363
        %375 = vmatpush.bf16.msra.mxu0 %v362
        %376 = vmatpush.bf16.msra.mxu0 %v361
        %377 = vmatpush.bf16.msra.mxu0 %v360
        %378 = vmatpush.bf16.msra.mxu0 %v359
        %379 = vmatpush.bf16.msra.mxu0 %v358
        %380 = vmatpush.bf16.msra.mxu0 %v357
        %381 = vmatmul.bf16.gmra.mxu0 %v315
        %v382 = vpop.f32.mrf.mxu0
        %v383 = vadd.f32 %v324, %v382
        %v384 = vpop.f32.mrf.mxu0
        %v385 = vadd.f32 %v324, %v384
        %386 = vmatmul.bf16.gmra.mxu0 %v316
        %v387 = vpop.f32.mrf.mxu0
        %v388 = vadd.f32 %v324, %v387
        %v389 = vpop.f32.mrf.mxu0
        %v390 = vadd.f32 %v324, %v389
        %391 = vmatmul.bf16.gmra.mxu0 %v317
        %v392 = vpop.f32.mrf.mxu0
        %v393 = vadd.f32 %v324, %v392
        %v394 = vpop.f32.mrf.mxu0
        %v395 = vadd.f32 %v324, %v394
        %396 = vmatmul.bf16.gmra.mxu0 %v318
        %v397 = vpop.f32.mrf.mxu0
        %v398 = vadd.f32 %v324, %v397
        %v399 = vpop.f32.mrf.mxu0
        %v400 = vadd.f32 %v324, %v399
        %401 = vmatmul.bf16.gmra.mxu0 %v319
        %v402 = vpop.f32.mrf.mxu0
        %v403 = vadd.f32 %v324, %v402
        %v404 = vpop.f32.mrf.mxu0
        %v405 = vadd.f32 %v324, %v404
        %406 = vmatmul.bf16.gmra.mxu0 %v320
        %v407 = vpop.f32.mrf.mxu0
        %v408 = vadd.f32 %v324, %v407
        %v409 = vpop.f32.mrf.mxu0
        %v410 = vadd.f32 %v324, %v409
        %411 = vmatmul.bf16.gmra.mxu0 %v321
        %v412 = vpop.f32.mrf.mxu0
        %v413 = vadd.f32 %v324, %v412
        %v414 = vpop.f32.mrf.mxu0
        %v415 = vadd.f32 %v324, %v414
        %416 = vmatmul.bf16.gmra.mxu0 %v322
        %v417 = vpop.f32.mrf.mxu0
        %v418 = vadd.f32 %v324, %v417
        %v419 = vpop.f32.mrf.mxu0
        %v420 = vadd.f32 %v324, %v419
        %421 = vdwg.mxu0
        %v422 = vmax.f32 %v383, 0.0
        %v423 = vmax.f32 %v385, 0.0
        %v424 = vmax.f32 %v388, 0.0
        %v425 = vmax.f32 %v390, 0.0
        %v426 = vmax.f32 %v393, 0.0
        %v427 = vmax.f32 %v395, 0.0
        %v428 = vmax.f32 %v398, 0.0
        %v429 = vmax.f32 %v400, 0.0
        %v430 = vmax.f32 %v403, 0.0
        %v431 = vmax.f32 %v405, 0.0
        %v432 = vmax.f32 %v408, 0.0
        %v433 = vmax.f32 %v410, 0.0
        %v434 = vmax.f32 %v413, 0.0
        %v435 = vmax.f32 %v415, 0.0
        %v436 = vmax.f32 %v418, 0.0
        %v437 = vmax.f32 %v420, 0.0
        %v438 = vld [vmem:[#allocation2 + $0x8] sm:$0xf]
        %v439 = vld [vmem:[#allocation2 + $0x24] sm:$0xf]
        %v440 = vld [vmem:[#allocation2 + $0x40] sm:$0xf]
        %v441 = vld [vmem:[#allocation2 + $0x5c] sm:$0xf]
        %v442 = vld [vmem:[#allocation2 + $0x78] sm:$0xf]
        %v443 = vld [vmem:[#allocation2 + $0x94] sm:$0xf]
        %v444 = vld [vmem:[#allocation2 + $0xb0] sm:$0xf]
        %v445 = vld [vmem:[#allocation2 + $0xcc] sm:$0xf]
        %v446 = vld [vmem:[#allocation2 + $0xe8] sm:$0xf]
        %v447 = vld [vmem:[#allocation2 + $0x104] sm:$0xf]
        %v448 = vld [vmem:[#allocation2 + $0x120] sm:$0xf]
        %v449 = vld [vmem:[#allocation2 + $0x13c] sm:$0xf]
        %v450 = vld [vmem:[#allocation2 + $0x158] sm:$0xf]
        %v451 = vld [vmem:[#allocation2 + $0x174] sm:$0xf]
        %v452 = vld [vmem:[#allocation2 + $0x190] sm:$0xf]
        %v453 = vld [vmem:[#allocation2 + $0x1ac] sm:$0xf]
        %v454 = vld [vmem:[#allocation2 + $0x1ac] sm:$0x8]
        %v455 = vpack.c.bf16 %v423, %v422
        %v456 = vpack.c.bf16 %v425, %v424
        %v457 = vpack.c.bf16 %v427, %v426
        %v458 = vpack.c.bf16 %v429, %v428
        %v459 = vpack.c.bf16 %v431, %v430
        %v460 = vpack.c.bf16 %v433, %v432
        %v461 = vpack.c.bf16 %v435, %v434
        %v462 = vpack.c.bf16 %v437, %v436
        %v463 = vunpack.c.l.bf16 %v454
        %v464 = vperm.slane %v463, 7
        %v481 = vunpack.c.l.b16 %v438
        %v482 = vunpack.c.l.b16 %v439
        %v483 = vunpack.c.l.b16 %v440
        %v484 = vunpack.c.l.b16 %v441
        %v485 = vunpack.c.l.b16 %v442
        %v486 = vunpack.c.l.b16 %v443
        %v487 = vunpack.c.l.b16 %v444
        %v488 = vunpack.c.l.b16 %v445
        %v489 = vunpack.c.l.b16 %v446
        %v490 = vunpack.c.l.b16 %v447
        %v491 = vunpack.c.l.b16 %v448
        %v492 = vunpack.c.l.b16 %v449
        %v493 = vunpack.c.l.b16 %v450
        %v494 = vunpack.c.l.b16 %v451
        %v495 = vunpack.c.l.b16 %v452
        %v496 = vunpack.c.l.b16 %v453
        %v497 = vpack.c.b16 %v482, %v481
        %v498 = vpack.c.b16 %v484, %v483
        %v499 = vpack.c.b16 %v486, %v485
        %v500 = vpack.c.b16 %v488, %v487
        %v501 = vpack.c.b16 %v490, %v489
        %v502 = vpack.c.b16 %v492, %v491
        %v503 = vpack.c.b16 %v494, %v493
        %v504 = vpack.c.b16 %v496, %v495
        %513 = vmatpush.bf16.msra.mxu0 %v504
        %514 = vmatpush.bf16.msra.mxu0 %v503
        %515 = vmatpush.bf16.msra.mxu0 %v502
        %516 = vmatpush.bf16.msra.mxu0 %v501
        %517 = vmatpush.bf16.msra.mxu0 %v500
        %518 = vmatpush.bf16.msra.mxu0 %v499
        %519 = vmatpush.bf16.msra.mxu0 %v498
        %520 = vmatpush.bf16.msra.mxu0 %v497
        %521 = vmatmul.bf16.gmra.mxu0 %v455
        %v522 = vpop.f32.mrf.mxu0
        %v523 = vadd.f32 %v464, %v522
        %v524 = vpop.f32.mrf.mxu0
        %v525 = vadd.f32 %v464, %v524
        %526 = vmatmul.bf16.gmra.mxu0 %v456
        %v527 = vpop.f32.mrf.mxu0
        %v528 = vadd.f32 %v464, %v527
        %v529 = vpop.f32.mrf.mxu0
        %v530 = vadd.f32 %v464, %v529
        %531 = vmatmul.bf16.gmra.mxu0 %v457
        %v532 = vpop.f32.mrf.mxu0
        %v533 = vadd.f32 %v464, %v532
        %v534 = vpop.f32.mrf.mxu0
        %v535 = vadd.f32 %v464, %v534
        %536 = vmatmul.bf16.gmra.mxu0 %v458
        %v537 = vpop.f32.mrf.mxu0
        %v538 = vadd.f32 %v464, %v537
        %v539 = vpop.f32.mrf.mxu0
        %v540 = vadd.f32 %v464, %v539
        %541 = vmatmul.bf16.gmra.mxu0 %v459
        %v542 = vpop.f32.mrf.mxu0
        %v543 = vadd.f32 %v464, %v542
        %v544 = vpop.f32.mrf.mxu0
        %v545 = vadd.f32 %v464, %v544
        %546 = vmatmul.bf16.gmra.mxu0 %v460
        %v547 = vpop.f32.mrf.mxu0
        %v548 = vadd.f32 %v464, %v547
        %v549 = vpop.f32.mrf.mxu0
        %v550 = vadd.f32 %v464, %v549
        %551 = vmatmul.bf16.gmra.mxu0 %v461
        %v552 = vpop.f32.mrf.mxu0
        %v553 = vadd.f32 %v464, %v552
        %v554 = vpop.f32.mrf.mxu0
        %v555 = vadd.f32 %v464, %v554
        %556 = vmatmul.bf16.gmra.mxu0 %v462
        %v557 = vpop.f32.mrf.mxu0
        %v558 = vadd.f32 %v464, %v557
        %v559 = vpop.f32.mrf.mxu0
        %v560 = vadd.f32 %v464, %v559
        %561 = vdwg.mxu0
        %v562 = vmax.f32 %v523, 0.0
        %v563 = vmax.f32 %v525, 0.0
        %v564 = vmax.f32 %v528, 0.0
        %v565 = vmax.f32 %v530, 0.0
        %v566 = vmax.f32 %v533, 0.0
        %v567 = vmax.f32 %v535, 0.0
        %v568 = vmax.f32 %v538, 0.0
        %v569 = vmax.f32 %v540, 0.0
        %v570 = vmax.f32 %v543, 0.0
        %v571 = vmax.f32 %v545, 0.0
        %v572 = vmax.f32 %v548, 0.0
        %v573 = vmax.f32 %v550, 0.0
        %v574 = vmax.f32 %v553, 0.0
        %v575 = vmax.f32 %v555, 0.0
        %v576 = vmax.f32 %v558, 0.0
        %v577 = vmax.f32 %v560, 0.0
        %v578 = vld [vmem:[#allocation2 + $0xc] sm:$0xf]
        %v579 = vld [vmem:[#allocation2 + $0x28] sm:$0xf]
        %v580 = vld [vmem:[#allocation2 + $0x44] sm:$0xf]
        %v581 = vld [vmem:[#allocation2 + $0x60] sm:$0xf]
        %v582 = vld [vmem:[#allocation2 + $0x7c] sm:$0xf]
        %v583 = vld [vmem:[#allocation2 + $0x98] sm:$0xf]
        %v584 = vld [vmem:[#allocation2 + $0xb4] sm:$0xf]
        %v585 = vld [vmem:[#allocation2 + $0xd0] sm:$0xf]
        %v586 = vld [vmem:[#allocation2 + $0xec] sm:$0xf]
        %v587 = vld [vmem:[#allocation2 + $0x108] sm:$0xf]
        %v588 = vld [vmem:[#allocation2 + $0x124] sm:$0xf]
        %v589 = vld [vmem:[#allocation2 + $0x140] sm:$0xf]
        %v590 = vld [vmem:[#allocation2 + $0x15c] sm:$0xf]
        %v591 = vld [vmem:[#allocation2 + $0x178] sm:$0xf]
        %v592 = vld [vmem:[#allocation2 + $0x194] sm:$0xf]
        %v593 = vld [vmem:[#allocation2 + $0x1b0] sm:$0xf]
        %v594 = vld [vmem:[#allocation2 + $0x1b0] sm:$0x8]
        %v595 = vpack.c.bf16 %v563, %v562
        %v596 = vpack.c.bf16 %v565, %v564
        %v597 = vpack.c.bf16 %v567, %v566
        %v598 = vpack.c.bf16 %v569, %v568
        %v599 = vpack.c.bf16 %v571, %v570
        %v600 = vpack.c.bf16 %v573, %v572
        %v601 = vpack.c.bf16 %v575, %v574
        %v602 = vpack.c.bf16 %v577, %v576
        %v603 = vunpack.c.l.bf16 %v594
        %v604 = vperm.slane %v603, 7
        %v621 = vunpack.c.l.b16 %v578
        %v622 = vunpack.c.l.b16 %v579
        %v623 = vunpack.c.l.b16 %v580
        %v624 = vunpack.c.l.b16 %v581
        %v625 = vunpack.c.l.b16 %v582
        %v626 = vunpack.c.l.b16 %v583
        %v627 = vunpack.c.l.b16 %v584
        %v628 = vunpack.c.l.b16 %v585
        %v629 = vunpack.c.l.b16 %v586
        %v630 = vunpack.c.l.b16 %v587
        %v631 = vunpack.c.l.b16 %v588
        %v632 = vunpack.c.l.b16 %v589
        %v633 = vunpack.c.l.b16 %v590
        %v634 = vunpack.c.l.b16 %v591
        %v635 = vunpack.c.l.b16 %v592
        %v636 = vunpack.c.l.b16 %v593
        %v637 = vpack.c.b16 %v622, %v621
        %v638 = vpack.c.b16 %v624, %v623
        %v639 = vpack.c.b16 %v626, %v625
        %v640 = vpack.c.b16 %v628, %v627
        %v641 = vpack.c.b16 %v630, %v629
        %v642 = vpack.c.b16 %v632, %v631
        %v643 = vpack.c.b16 %v634, %v633
        %v644 = vpack.c.b16 %v636, %v635
        %653 = vmatpush.bf16.msra.mxu0 %v644
        %654 = vmatpush.bf16.msra.mxu0 %v643
        %655 = vmatpush.bf16.msra.mxu0 %v642
        %656 = vmatpush.bf16.msra.mxu0 %v641
        %657 = vmatpush.bf16.msra.mxu0 %v640
        %658 = vmatpush.bf16.msra.mxu0 %v639
        %659 = vmatpush.bf16.msra.mxu0 %v638
        %660 = vmatpush.bf16.msra.mxu0 %v637
        %661 = vmatmul.bf16.gmra.mxu0 %v595
        %v662 = vpop.f32.mrf.mxu0
        %v663 = vadd.f32 %v604, %v662
        %v664 = vpop.f32.mrf.mxu0
        %v665 = vadd.f32 %v604, %v664
        %666 = vmatmul.bf16.gmra.mxu0 %v596
        %v667 = vpop.f32.mrf.mxu0
        %v668 = vadd.f32 %v604, %v667
        %v669 = vpop.f32.mrf.mxu0
        %v670 = vadd.f32 %v604, %v669
        %671 = vmatmul.bf16.gmra.mxu0 %v597
        %v672 = vpop.f32.mrf.mxu0
        %v673 = vadd.f32 %v604, %v672
        %v674 = vpop.f32.mrf.mxu0
        %v675 = vadd.f32 %v604, %v674
        %676 = vmatmul.bf16.gmra.mxu0 %v598
        %v677 = vpop.f32.mrf.mxu0
        %v678 = vadd.f32 %v604, %v677
        %v679 = vpop.f32.mrf.mxu0
        %v680 = vadd.f32 %v604, %v679
        %681 = vmatmul.bf16.gmra.mxu0 %v599
        %v682 = vpop.f32.mrf.mxu0
        %v683 = vadd.f32 %v604, %v682
        %v684 = vpop.f32.mrf.mxu0
        %v685 = vadd.f32 %v604, %v684
        %686 = vmatmul.bf16.gmra.mxu0 %v600
        %v687 = vpop.f32.mrf.mxu0
        %v688 = vadd.f32 %v604, %v687
        %v689 = vpop.f32.mrf.mxu0
        %v690 = vadd.f32 %v604, %v689
        %691 = vmatmul.bf16.gmra.mxu0 %v601
        %v692 = vpop.f32.mrf.mxu0
        %v693 = vadd.f32 %v604, %v692
        %v694 = vpop.f32.mrf.mxu0
        %v695 = vadd.f32 %v604, %v694
        %696 = vmatmul.bf16.gmra.mxu0 %v602
        %v697 = vpop.f32.mrf.mxu0
        %v698 = vadd.f32 %v604, %v697
        %v699 = vpop.f32.mrf.mxu0
        %v700 = vadd.f32 %v604, %v699
        %701 = vdwg.mxu0
        %v702 = vmax.f32 %v663, 0.0
        %v703 = vmax.f32 %v665, 0.0
        %v704 = vmax.f32 %v668, 0.0
        %v705 = vmax.f32 %v670, 0.0
        %v706 = vmax.f32 %v673, 0.0
        %v707 = vmax.f32 %v675, 0.0
        %v708 = vmax.f32 %v678, 0.0
        %v709 = vmax.f32 %v680, 0.0
        %v710 = vmax.f32 %v683, 0.0
        %v711 = vmax.f32 %v685, 0.0
        %v712 = vmax.f32 %v688, 0.0
        %v713 = vmax.f32 %v690, 0.0
        %v714 = vmax.f32 %v693, 0.0
        %v715 = vmax.f32 %v695, 0.0
        %v716 = vmax.f32 %v698, 0.0
        %v717 = vmax.f32 %v700, 0.0
        %v718 = vld [vmem:[#allocation2 + $0x10] sm:$0xf]
        %v719 = vld [vmem:[#allocation2 + $0x2c] sm:$0xf]
        %v720 = vld [vmem:[#allocation2 + $0x48] sm:$0xf]
        %v721 = vld [vmem:[#allocation2 + $0x64] sm:$0xf]
        %v722 = vld [vmem:[#allocation2 + $0x80] sm:$0xf]
        %v723 = vld [vmem:[#allocation2 + $0x9c] sm:$0xf]
        %v724 = vld [vmem:[#allocation2 + $0xb8] sm:$0xf]
        %v725 = vld [vmem:[#allocation2 + $0xd4] sm:$0xf]
        %v726 = vld [vmem:[#allocation2 + $0xf0] sm:$0xf]
        %v727 = vld [vmem:[#allocation2 + $0x10c] sm:$0xf]
        %v728 = vld [vmem:[#allocation2 + $0x128] sm:$0xf]
        %v729 = vld [vmem:[#allocation2 + $0x144] sm:$0xf]
        %v730 = vld [vmem:[#allocation2 + $0x160] sm:$0xf]
        %v731 = vld [vmem:[#allocation2 + $0x17c] sm:$0xf]
        %v732 = vld [vmem:[#allocation2 + $0x198] sm:$0xf]
        %v733 = vld [vmem:[#allocation2 + $0x1b4] sm:$0xf]
        %v734 = vld [vmem:[#allocation2 + $0x1b4] sm:$0x8]
        %v735 = vpack.c.bf16 %v703, %v702
        %v736 = vpack.c.bf16 %v705, %v704
        %v737 = vpack.c.bf16 %v707, %v706
        %v738 = vpack.c.bf16 %v709, %v708
        %v739 = vpack.c.bf16 %v711, %v710
        %v740 = vpack.c.bf16 %v713, %v712
        %v741 = vpack.c.bf16 %v715, %v714
        %v742 = vpack.c.bf16 %v717, %v716
        %v743 = vunpack.c.l.bf16 %v734
        %v744 = vperm.slane %v743, 7
        %v761 = vunpack.c.l.b16 %v718
        %v762 = vunpack.c.l.b16 %v719
        %v763 = vunpack.c.l.b16 %v720
        %v764 = vunpack.c.l.b16 %v721
        %v765 = vunpack.c.l.b16 %v722
        %v766 = vunpack.c.l.b16 %v723
        %v767 = vunpack.c.l.b16 %v724
        %v768 = vunpack.c.l.b16 %v725
        %v769 = vunpack.c.l.b16 %v726
        %v770 = vunpack.c.l.b16 %v727
        %v771 = vunpack.c.l.b16 %v728
        %v772 = vunpack.c.l.b16 %v729
        %v773 = vunpack.c.l.b16 %v730
        %v774 = vunpack.c.l.b16 %v731
        %v775 = vunpack.c.l.b16 %v732
        %v776 = vunpack.c.l.b16 %v733
        %v777 = vpack.c.b16 %v762, %v761
        %v778 = vpack.c.b16 %v764, %v763
        %v779 = vpack.c.b16 %v766, %v765
        %v780 = vpack.c.b16 %v768, %v767
        %v781 = vpack.c.b16 %v770, %v769
        %v782 = vpack.c.b16 %v772, %v771
        %v783 = vpack.c.b16 %v774, %v773
        %v784 = vpack.c.b16 %v776, %v775
        %793 = vmatpush.bf16.msra.mxu0 %v784
        %794 = vmatpush.bf16.msra.mxu0 %v783
        %795 = vmatpush.bf16.msra.mxu0 %v782
        %796 = vmatpush.bf16.msra.mxu0 %v781
        %797 = vmatpush.bf16.msra.mxu0 %v780
        %798 = vmatpush.bf16.msra.mxu0 %v779
        %799 = vmatpush.bf16.msra.mxu0 %v778
        %800 = vmatpush.bf16.msra.mxu0 %v777
        %801 = vmatmul.bf16.gmra.mxu0 %v735
        %v802 = vpop.f32.mrf.mxu0
        %v803 = vadd.f32 %v744, %v802
        %v804 = vpop.f32.mrf.mxu0
        %v805 = vadd.f32 %v744, %v804
        %806 = vmatmul.bf16.gmra.mxu0 %v736
        %v807 = vpop.f32.mrf.mxu0
        %v808 = vadd.f32 %v744, %v807
        %v809 = vpop.f32.mrf.mxu0
        %v810 = vadd.f32 %v744, %v809
        %811 = vmatmul.bf16.gmra.mxu0 %v737
        %v812 = vpop.f32.mrf.mxu0
        %v813 = vadd.f32 %v744, %v812
        %v814 = vpop.f32.mrf.mxu0
        %v815 = vadd.f32 %v744, %v814
        %816 = vmatmul.bf16.gmra.mxu0 %v738
        %v817 = vpop.f32.mrf.mxu0
        %v818 = vadd.f32 %v744, %v817
        %v819 = vpop.f32.mrf.mxu0
        %v820 = vadd.f32 %v744, %v819
        %821 = vmatmul.bf16.gmra.mxu0 %v739
        %v822 = vpop.f32.mrf.mxu0
        %v823 = vadd.f32 %v744, %v822
        %v824 = vpop.f32.mrf.mxu0
        %v825 = vadd.f32 %v744, %v824
        %826 = vmatmul.bf16.gmra.mxu0 %v740
        %v827 = vpop.f32.mrf.mxu0
        %v828 = vadd.f32 %v744, %v827
        %v829 = vpop.f32.mrf.mxu0
        %v830 = vadd.f32 %v744, %v829
        %831 = vmatmul.bf16.gmra.mxu0 %v741
        %v832 = vpop.f32.mrf.mxu0
        %v833 = vadd.f32 %v744, %v832
        %v834 = vpop.f32.mrf.mxu0
        %v835 = vadd.f32 %v744, %v834
        %836 = vmatmul.bf16.gmra.mxu0 %v742
        %v837 = vpop.f32.mrf.mxu0
        %v838 = vadd.f32 %v744, %v837
        %v839 = vpop.f32.mrf.mxu0
        %v840 = vadd.f32 %v744, %v839
        %841 = vdwg.mxu0
        %v842 = vmax.f32 %v803, 0.0
        %v843 = vmax.f32 %v805, 0.0
        %v844 = vmax.f32 %v808, 0.0
        %v845 = vmax.f32 %v810, 0.0
        %v846 = vmax.f32 %v813, 0.0
        %v847 = vmax.f32 %v815, 0.0
        %v848 = vmax.f32 %v818, 0.0
        %v849 = vmax.f32 %v820, 0.0
        %v850 = vmax.f32 %v823, 0.0
        %v851 = vmax.f32 %v825, 0.0
        %v852 = vmax.f32 %v828, 0.0
        %v853 = vmax.f32 %v830, 0.0
        %v854 = vmax.f32 %v833, 0.0
        %v855 = vmax.f32 %v835, 0.0
        %v856 = vmax.f32 %v838, 0.0
        %v857 = vmax.f32 %v840, 0.0
        %v858 = vld [vmem:[#allocation2 + $0x14] sm:$0xf]
        %v859 = vld [vmem:[#allocation2 + $0x30] sm:$0xf]
        %v860 = vld [vmem:[#allocation2 + $0x4c] sm:$0xf]
        %v861 = vld [vmem:[#allocation2 + $0x68] sm:$0xf]
        %v862 = vld [vmem:[#allocation2 + $0x84] sm:$0xf]
        %v863 = vld [vmem:[#allocation2 + $0xa0] sm:$0xf]
        %v864 = vld [vmem:[#allocation2 + $0xbc] sm:$0xf]
        %v865 = vld [vmem:[#allocation2 + $0xd8] sm:$0xf]
        %v866 = vld [vmem:[#allocation2 + $0xf4] sm:$0xf]
        %v867 = vld [vmem:[#allocation2 + $0x110] sm:$0xf]
        %v868 = vld [vmem:[#allocation2 + $0x12c] sm:$0xf]
        %v869 = vld [vmem:[#allocation2 + $0x148] sm:$0xf]
        %v870 = vld [vmem:[#allocation2 + $0x164] sm:$0xf]
        %v871 = vld [vmem:[#allocation2 + $0x180] sm:$0xf]
        %v872 = vld [vmem:[#allocation2 + $0x19c] sm:$0xf]
        %v873 = vld [vmem:[#allocation2 + $0x1b8] sm:$0xf]
        %v874 = vld [vmem:[#allocation2 + $0x1b8] sm:$0x8]
        %v875 = vpack.c.bf16 %v843, %v842
        %v876 = vpack.c.bf16 %v845, %v844
        %v877 = vpack.c.bf16 %v847, %v846
        %v878 = vpack.c.bf16 %v849, %v848
        %v879 = vpack.c.bf16 %v851, %v850
        %v880 = vpack.c.bf16 %v853, %v852
        %v881 = vpack.c.bf16 %v855, %v854
        %v882 = vpack.c.bf16 %v857, %v856
        %v883 = vunpack.c.l.bf16 %v874
        %v884 = vperm.slane %v883, 7
        %v901 = vunpack.c.l.b16 %v858
        %v902 = vunpack.c.l.b16 %v859
        %v903 = vunpack.c.l.b16 %v860
        %v904 = vunpack.c.l.b16 %v861
        %v905 = vunpack.c.l.b16 %v862
        %v906 = vunpack.c.l.b16 %v863
        %v907 = vunpack.c.l.b16 %v864
        %v908 = vunpack.c.l.b16 %v865
        %v909 = vunpack.c.l.b16 %v866
        %v910 = vunpack.c.l.b16 %v867
        %v911 = vunpack.c.l.b16 %v868
        %v912 = vunpack.c.l.b16 %v869
        %v913 = vunpack.c.l.b16 %v870
        %v914 = vunpack.c.l.b16 %v871
        %v915 = vunpack.c.l.b16 %v872
        %v916 = vunpack.c.l.b16 %v873
        %v917 = vpack.c.b16 %v902, %v901
        %v918 = vpack.c.b16 %v904, %v903
        %v919 = vpack.c.b16 %v906, %v905
        %v920 = vpack.c.b16 %v908, %v907
        %v921 = vpack.c.b16 %v910, %v909
        %v922 = vpack.c.b16 %v912, %v911
        %v923 = vpack.c.b16 %v914, %v913
        %v924 = vpack.c.b16 %v916, %v915
        %933 = vmatpush.bf16.msra.mxu0 %v924
        %934 = vmatpush.bf16.msra.mxu0 %v923
        %935 = vmatpush.bf16.msra.mxu0 %v922
        %936 = vmatpush.bf16.msra.mxu0 %v921
        %937 = vmatpush.bf16.msra.mxu0 %v920
        %938 = vmatpush.bf16.msra.mxu0 %v919
        %939 = vmatpush.bf16.msra.mxu0 %v918
        %940 = vmatpush.bf16.msra.mxu0 %v917
        %941 = vmatmul.bf16.gmra.mxu0 %v875
        %v942 = vpop.f32.mrf.mxu0
        %v943 = vadd.f32 %v884, %v942
        %v944 = vpop.f32.mrf.mxu0
        %v945 = vadd.f32 %v884, %v944
        %946 = vmatmul.bf16.gmra.mxu0 %v876
        %v947 = vpop.f32.mrf.mxu0
        %v948 = vadd.f32 %v884, %v947
        %v949 = vpop.f32.mrf.mxu0
        %v950 = vadd.f32 %v884, %v949
        %951 = vmatmul.bf16.gmra.mxu0 %v877
        %v952 = vpop.f32.mrf.mxu0
        %v953 = vadd.f32 %v884, %v952
        %v954 = vpop.f32.mrf.mxu0
        %v955 = vadd.f32 %v884, %v954
        %956 = vmatmul.bf16.gmra.mxu0 %v878
        %v957 = vpop.f32.mrf.mxu0
        %v958 = vadd.f32 %v884, %v957
        %v959 = vpop.f32.mrf.mxu0
        %v960 = vadd.f32 %v884, %v959
        %961 = vmatmul.bf16.gmra.mxu0 %v879
        %v962 = vpop.f32.mrf.mxu0
        %v963 = vadd.f32 %v884, %v962
        %v964 = vpop.f32.mrf.mxu0
        %v965 = vadd.f32 %v884, %v964
        %966 = vmatmul.bf16.gmra.mxu0 %v880
        %v967 = vpop.f32.mrf.mxu0
        %v968 = vadd.f32 %v884, %v967
        %v969 = vpop.f32.mrf.mxu0
        %v970 = vadd.f32 %v884, %v969
        %971 = vmatmul.bf16.gmra.mxu0 %v881
        %v972 = vpop.f32.mrf.mxu0
        %v973 = vadd.f32 %v884, %v972
        %v974 = vpop.f32.mrf.mxu0
        %v975 = vadd.f32 %v884, %v974
        %976 = vmatmul.bf16.gmra.mxu0 %v882
        %v977 = vpop.f32.mrf.mxu0
        %v978 = vadd.f32 %v884, %v977
        %v979 = vpop.f32.mrf.mxu0
        %v980 = vadd.f32 %v884, %v979
        %981 = vdwg.mxu0
        %v982 = vmax.f32 %v943, 0.0
        %v983 = vmax.f32 %v945, 0.0
        %v984 = vmax.f32 %v948, 0.0
        %v985 = vmax.f32 %v950, 0.0
        %v986 = vmax.f32 %v953, 0.0
        %v987 = vmax.f32 %v955, 0.0
        %v988 = vmax.f32 %v958, 0.0
        %v989 = vmax.f32 %v960, 0.0
        %v990 = vmax.f32 %v963, 0.0
        %v991 = vmax.f32 %v965, 0.0
        %v992 = vmax.f32 %v968, 0.0
        %v993 = vmax.f32 %v970, 0.0
        %v994 = vmax.f32 %v973, 0.0
        %v995 = vmax.f32 %v975, 0.0
        %v996 = vmax.f32 %v978, 0.0
        %v997 = vmax.f32 %v980, 0.0
        %v998 = vld [vmem:[#allocation2 + $0x18] sm:$0xf]
        %v999 = vld [vmem:[#allocation2 + $0x34] sm:$0xf]
        %v1000 = vld [vmem:[#allocation2 + $0x50] sm:$0xf]
        %v1001 = vld [vmem:[#allocation2 + $0x6c] sm:$0xf]
        %v1002 = vld [vmem:[#allocation2 + $0x88] sm:$0xf]
        %v1003 = vld [vmem:[#allocation2 + $0xa4] sm:$0xf]
        %v1004 = vld [vmem:[#allocation2 + $0xc0] sm:$0xf]
        %v1005 = vld [vmem:[#allocation2 + $0xdc] sm:$0xf]
        %v1006 = vld [vmem:[#allocation2 + $0xf8] sm:$0xf]
        %v1007 = vld [vmem:[#allocation2 + $0x114] sm:$0xf]
        %v1008 = vld [vmem:[#allocation2 + $0x130] sm:$0xf]
        %v1009 = vld [vmem:[#allocation2 + $0x14c] sm:$0xf]
        %v1010 = vld [vmem:[#allocation2 + $0x168] sm:$0xf]
        %v1011 = vld [vmem:[#allocation2 + $0x184] sm:$0xf]
        %v1012 = vld [vmem:[#allocation2 + $0x1a0] sm:$0xf]
        %v1013 = vld [vmem:[#allocation2 + $0x1bc] sm:$0xf]
        %v1014 = vld [vmem:[#allocation2 + $0x1bc] sm:$0x8]
        %v1015 = vpack.c.bf16 %v983, %v982
        %v1016 = vpack.c.bf16 %v985, %v984
        %v1017 = vpack.c.bf16 %v987, %v986
        %v1018 = vpack.c.bf16 %v989, %v988
        %v1019 = vpack.c.bf16 %v991, %v990
        %v1020 = vpack.c.bf16 %v993, %v992
        %v1021 = vpack.c.bf16 %v995, %v994
        %v1022 = vpack.c.bf16 %v997, %v996
        %v1023 = vunpack.c.l.bf16 %v1014
        %v1024 = vperm.slane %v1023, 7
        %v1041 = vunpack.c.l.b16 %v998
        %v1042 = vunpack.c.l.b16 %v999
        %v1043 = vunpack.c.l.b16 %v1000
        %v1044 = vunpack.c.l.b16 %v1001
        %v1045 = vunpack.c.l.b16 %v1002
        %v1046 = vunpack.c.l.b16 %v1003
        %v1047 = vunpack.c.l.b16 %v1004
        %v1048 = vunpack.c.l.b16 %v1005
        %v1049 = vunpack.c.l.b16 %v1006
        %v1050 = vunpack.c.l.b16 %v1007
        %v1051 = vunpack.c.l.b16 %v1008
        %v1052 = vunpack.c.l.b16 %v1009
        %v1053 = vunpack.c.l.b16 %v1010
        %v1054 = vunpack.c.l.b16 %v1011
        %v1055 = vunpack.c.l.b16 %v1012
        %v1056 = vunpack.c.l.b16 %v1013
        %v1057 = vpack.c.b16 %v1042, %v1041
        %v1058 = vpack.c.b16 %v1044, %v1043
        %v1059 = vpack.c.b16 %v1046, %v1045
        %v1060 = vpack.c.b16 %v1048, %v1047
        %v1061 = vpack.c.b16 %v1050, %v1049
        %v1062 = vpack.c.b16 %v1052, %v1051
        %v1063 = vpack.c.b16 %v1054, %v1053
        %v1064 = vpack.c.b16 %v1056, %v1055
        %1073 = vmatpush.bf16.msra.mxu0 %v1064
        %1074 = vmatpush.bf16.msra.mxu0 %v1063
        %1075 = vmatpush.bf16.msra.mxu0 %v1062
        %1076 = vmatpush.bf16.msra.mxu0 %v1061
        %1077 = vmatpush.bf16.msra.mxu0 %v1060
        %1078 = vmatpush.bf16.msra.mxu0 %v1059
        %1079 = vmatpush.bf16.msra.mxu0 %v1058
        %1080 = vmatpush.bf16.msra.mxu0 %v1057
        %1081 = vmatmul.bf16.gmra.mxu0 %v1015
        %v1082 = vpop.f32.mrf.mxu0
        %v1083 = vadd.f32 %v1024, %v1082
        %v1084 = vpop.f32.mrf.mxu0
        %v1085 = vadd.f32 %v1024, %v1084
        %1086 = vmatmul.bf16.gmra.mxu0 %v1016
        %v1087 = vpop.f32.mrf.mxu0
        %v1088 = vadd.f32 %v1024, %v1087
        %v1089 = vpop.f32.mrf.mxu0
        %v1090 = vadd.f32 %v1024, %v1089
        %1091 = vmatmul.bf16.gmra.mxu0 %v1017
        %v1092 = vpop.f32.mrf.mxu0
        %v1093 = vadd.f32 %v1024, %v1092
        %v1094 = vpop.f32.mrf.mxu0
        %v1095 = vadd.f32 %v1024, %v1094
        %1096 = vmatmul.bf16.gmra.mxu0 %v1018
        %v1097 = vpop.f32.mrf.mxu0
        %v1098 = vadd.f32 %v1024, %v1097
        %v1099 = vpop.f32.mrf.mxu0
        %v1100 = vadd.f32 %v1024, %v1099
        %1101 = vmatmul.bf16.gmra.mxu0 %v1019
        %v1102 = vpop.f32.mrf.mxu0
        %v1103 = vadd.f32 %v1024, %v1102
        %v1104 = vpop.f32.mrf.mxu0
        %v1105 = vadd.f32 %v1024, %v1104
        %1106 = vmatmul.bf16.gmra.mxu0 %v1020
        %v1107 = vpop.f32.mrf.mxu0
        %v1108 = vadd.f32 %v1024, %v1107
        %v1109 = vpop.f32.mrf.mxu0
        %v1110 = vadd.f32 %v1024, %v1109
        %1111 = vmatmul.bf16.gmra.mxu0 %v1021
        %v1112 = vpop.f32.mrf.mxu0
        %v1113 = vadd.f32 %v1024, %v1112
        %v1114 = vpop.f32.mrf.mxu0
        %v1115 = vadd.f32 %v1024, %v1114
        %1116 = vmatmul.bf16.gmra.mxu0 %v1022
        %v1117 = vpop.f32.mrf.mxu0
        %v1118 = vadd.f32 %v1024, %v1117
        %v1119 = vpop.f32.mrf.mxu0
        %v1120 = vadd.f32 %v1024, %v1119
        %1121 = vdwg.mxu0
        %v1122 = vsub.f32 0.0, %v1083
        %v1123 = vsub.f32 0.0, %v1085
        %v1124 = vsub.f32 0.0, %v1088
        %v1125 = vsub.f32 0.0, %v1090
        %v1126 = vsub.f32 0.0, %v1093
        %v1127 = vsub.f32 0.0, %v1095
        %v1128 = vsub.f32 0.0, %v1098
        %v1129 = vsub.f32 0.0, %v1100
        %v1130 = vsub.f32 0.0, %v1103
        %v1131 = vsub.f32 0.0, %v1105
        %v1132 = vsub.f32 0.0, %v1108
        %v1133 = vsub.f32 0.0, %v1110
        %v1134 = vsub.f32 0.0, %v1113
        %v1135 = vsub.f32 0.0, %v1115
        %v1136 = vsub.f32 0.0, %v1118
        %v1137 = vsub.f32 0.0, %v1120
        %v1138 = vmul.f32 %v1122, 1.442695
        %v1139 = vpow.pop %v1138
        %v1140 = vmul.f32 %v1123, 1.442695
        %v1141 = vpow.pop %v1140
        %v1142 = vmul.f32 %v1124, 1.442695
        %v1143 = vpow.pop %v1142
        %v1144 = vmul.f32 %v1125, 1.442695
        %v1145 = vpow.pop %v1144
        %v1146 = vmul.f32 %v1126, 1.442695
        %v1147 = vpow.pop %v1146
        %v1148 = vmul.f32 %v1127, 1.442695
        %v1149 = vpow.pop %v1148
        %v1150 = vmul.f32 %v1128, 1.442695
        %v1151 = vpow.pop %v1150
        %v1152 = vmul.f32 %v1129, 1.442695
        %v1153 = vpow.pop %v1152
        %v1154 = vmul.f32 %v1130, 1.442695
        %v1155 = vpow.pop %v1154
        %v1156 = vmul.f32 %v1131, 1.442695
        %v1157 = vpow.pop %v1156
        %v1158 = vmul.f32 %v1132, 1.442695
        %v1159 = vpow.pop %v1158
        %v1160 = vmul.f32 %v1133, 1.442695
        %v1161 = vpow.pop %v1160
        %v1162 = vmul.f32 %v1134, 1.442695
        %v1163 = vpow.pop %v1162
        %v1164 = vmul.f32 %v1135, 1.442695
        %v1165 = vpow.pop %v1164
        %v1166 = vmul.f32 %v1136, 1.442695
        %v1167 = vpow.pop %v1166
        %v1168 = vmul.f32 %v1137, 1.442695
        %v1169 = vpow.pop %v1168
        %v1170 = vadd.f32 %v1139, 1.0
        %v1171 = vadd.f32 %v1141, 1.0
        %v1172 = vadd.f32 %v1143, 1.0
        %v1173 = vadd.f32 %v1145, 1.0
        %v1174 = vadd.f32 %v1147, 1.0
        %v1175 = vadd.f32 %v1149, 1.0
        %v1176 = vadd.f32 %v1151, 1.0
        %v1177 = vadd.f32 %v1153, 1.0
        %v1178 = vadd.f32 %v1155, 1.0
        %v1179 = vadd.f32 %v1157, 1.0
        %v1180 = vadd.f32 %v1159, 1.0
        %v1181 = vadd.f32 %v1161, 1.0
        %v1182 = vadd.f32 %v1163, 1.0
        %v1183 = vadd.f32 %v1165, 1.0
        %v1184 = vadd.f32 %v1167, 1.0
        %v1185 = vadd.f32 %v1169, 1.0
        %v1186 = vrcp.pop %v1170
        %v1187 = vrcp.pop %v1171
        %v1188 = vrcp.pop %v1172
        %v1189 = vrcp.pop %v1173
        %v1190 = vrcp.pop %v1174
        %v1191 = vrcp.pop %v1175
        %v1192 = vrcp.pop %v1176
        %v1193 = vrcp.pop %v1177
        %v1194 = vrcp.pop %v1178
        %v1195 = vrcp.pop %v1179
        %v1196 = vrcp.pop %v1180
        %v1197 = vrcp.pop %v1181
        %v1198 = vrcp.pop %v1182
        %v1199 = vrcp.pop %v1183
        %v1200 = vrcp.pop %v1184
        %v1201 = vrcp.pop %v1185
        %vm1202 = vcmask 7168
        %1203 = vst.msk [vmem:[%s162] sm:$0xff] %vm1202, %v1186
        %1204 = vst.msk [vmem:[%s162 + $0x8] sm:$0xff] %vm1202, %v1187
        %1205 = vst.msk [vmem:[%s162 + $0x10] sm:$0xff] %vm1202, %v1188
        %1206 = vst.msk [vmem:[%s162 + $0x18] sm:$0xff] %vm1202, %v1189
        %1207 = vst.msk [vmem:[%s162 + $0x20] sm:$0xff] %vm1202, %v1190
        %1208 = vst.msk [vmem:[%s162 + $0x28] sm:$0xff] %vm1202, %v1191
        %1209 = vst.msk [vmem:[%s162 + $0x30] sm:$0xff] %vm1202, %v1192
        %1210 = vst.msk [vmem:[%s162 + $0x38] sm:$0xff] %vm1202, %v1193
        %1211 = vst.msk [vmem:[%s162 + $0x40] sm:$0xff] %vm1202, %v1194
        %1212 = vst.msk [vmem:[%s162 + $0x48] sm:$0xff] %vm1202, %v1195
        %1213 = vst.msk [vmem:[%s162 + $0x50] sm:$0xff] %vm1202, %v1196
        %1214 = vst.msk [vmem:[%s162 + $0x58] sm:$0xff] %vm1202, %v1197
        %1215 = vst.msk [vmem:[%s162 + $0x60] sm:$0xff] %vm1202, %v1198
        %1216 = vst.msk [vmem:[%s162 + $0x68] sm:$0xff] %vm1202, %v1199
        %1217 = vst.msk [vmem:[%s162 + $0x70] sm:$0xff] %vm1202, %v1200
        %1218 = vst.msk [vmem:[%s162 + $0x78] sm:$0xff] %vm1202, %v1201
        %s1219 = smul.u32 16, %s14
        %p1220 = scmp.lt.s32.totalorder %s1219, 31
        %s1221 = scalar_select %p1220, %s1219, 31
        %s1222 = smul.addr %s1221, 8
        %s1223 = scalar_lea.vmem %s2, %s1222
        // Predicated region
        $region33: #{tpu_custom_call.1} parent=27 // pred_check
          %p1224 = pneg %p79
        $region34: #{tpu_custom_call.1} parent=27 // pred_check_branch
          %1226 = sbr.rel (%p1224) target = $region36
        $region35: #{tpu_custom_call.1} parent=27 // pred_region
          %s1227 = smul.u32 16, %s14
        $region36: #{tpu_custom_call.1} parent=27 // pred_fallthru
          _
      $region28: #{tpu_custom_call.1} parent=5 // pred_fallthru
        _
      %p1228 = scmp.le.s32.totalorder 2, %s9
      // Predicated region
      $region37: #{tpu_custom_call.1} parent=5 // pred_check
        %p1229 = pneg %p1228
      $region38: #{tpu_custom_call.1} parent=5 // pred_check_branch
        %1231 = sbr.rel (%p1229) target = $region40
      $region39: #{tpu_custom_call.1} parent=5 // pred_region
        %s1232 = ssub.s32 %s9, 2
        // Predicated region
        $region41: #{tpu_custom_call.1} parent=39 // pred_check
          %p1233 = pneg %p85
        $region42: #{tpu_custom_call.1} parent=39 // pred_check_branch
          %1235 = sbr.rel (%p1233) target = $region44
        $region43: #{tpu_custom_call.1} parent=39 // pred_region
          %s1236 = smul.u32 16, %s15
          %p1237 = scmp.lt.s32.totalorder %s1236, 31
          %s1238 = scalar_select %p1237, %s1236, 31
          %s1239 = smul.addr %s1238, 8
          %s1240 = scalar_lea.vmem %s2, %s1239
        $region44: #{tpu_custom_call.1} parent=39 // pred_fallthru
          _
      $region40: #{tpu_custom_call.1} parent=5 // pred_fallthru
        _
    $region6: #{tpu_custom_call.1} parent=1 // loop_footer
      %s13 = sadd.s32 1, %s9
    $region7: #{tpu_custom_call.1} parent=1 // loop_footer_branch
      %8 = sbr.rel target = $region3
    $region8: #{tpu_custom_call.1} parent=1 // loop_exit
      _
    %1241 = vsyncpa [#allocation3], 1
    %s1242 = scalar_lea.sflag [#allocation3], 1
    %1243 = vsyncpa %s1242, 1

</llo_original>
